<compile_context>
chip_gen: v7x
topology: tpu7x:2x2x1
jax: 0.10.0
libtpu: 0.0.40
codegen_flags: <defaults>
</compile_context>

<pallas_src>
import jax
import jax.numpy as jnp
from jax.experimental import pallas as pl
from jax.experimental.pallas import tpu as pltpu

_LANE = 128


def _chomp_copy_kernel(x_ref, o_ref):
    # Full-row path: x block is (TR, L), o block is (TR, L_out) -> static slice.
    # Tiled path:    identical block shapes -> the slice is a full-width no-op.
    o_ref[...] = x_ref[:, : o_ref.shape[1]]


def chomp1d(x: jax.Array, chomp_size: int, *, block_bytes: int = 4 << 20) -> jax.Array:
    """Pallas implementation of Chomp1d: x[:, :, :-chomp_size]."""
    N, C, L = x.shape

    # Documented divergence from PyTorch's `x[:, :, :-0]` (which is empty):
    # chomp_size == 0 is treated as a no-op, matching every real TCN use.
    if chomp_size == 0:
        return x
    if not (0 < chomp_size < L):
        raise ValueError("chomp_size must be in [0, L)")

    L_out = L - chomp_size
    R = N * C
    x2 = x.reshape(R, L)  # free: C-contiguous view

    itemsize = jnp.dtype(x.dtype).itemsize
    # Min sublane multiple per packed dtype: f32->8, bf16->16, int8/fp8->32.
    sub = {4: 8, 2: 16, 1: 32}.get(itemsize, 8)

    full_row_bytes = L * itemsize
    use_full_row = (L_out < _LANE) or (
        chomp_size * 10 <= L and sub * full_row_bytes <= block_bytes
    )

    if use_full_row:
        # -------- FULL-ROW path: (TR, L) in -> (TR, L_out) out, 1-D row grid.
        TR = max(sub, (block_bytes // full_row_bytes) // sub * sub)
        if TR >= R:
            TR = R
            # Split into >=2 row slabs when cheap so both v7x TCs get work.
            if R >= 2 * sub:
                half = -(-((R + 1) // 2) // sub) * sub  # ceil(R/2) rounded up to sub
                if half < R:
                    TR = half
        TL_in, TL_out = L, L_out
        grid = (pl.cdiv(R, TR),)
        in_specs = [pl.BlockSpec((TR, TL_in), lambda r: (r, 0))]
        out_specs = pl.BlockSpec((TR, TL_out), lambda r: (r, 0))
        dim_sem = ("parallel",)
    else:
        # -------- TILED path: lane-dense blocks, wide TL / small TR.
        if R <= 256:
            TR = R  # full dim: always legal
        else:
            TR = max(sub, 256 // sub * sub)
        TL = max(_LANE, (block_bytes // (TR * itemsize)) // _LANE * _LANE)
        TL = min(TL, (L_out // _LANE) * _LANE)
        TL_in = TL_out = TL
        n_r, n_l = pl.cdiv(R, TR), pl.cdiv(L_out, TL)
        # Put the larger axis first so megacore sharding has enough blocks.
        if n_r >= n_l:
            grid = (n_r, n_l)
            in_specs = [pl.BlockSpec((TR, TL), lambda r, l: (r, l))]
            out_specs = pl.BlockSpec((TR, TL), lambda r, l: (r, l))
        else:
            grid = (n_l, n_r)
            in_specs = [pl.BlockSpec((TR, TL), lambda l, r: (r, l))]
            out_specs = pl.BlockSpec((TR, TL), lambda l, r: (r, l))
        dim_sem = ("parallel", "parallel")

    # Double-buffered VMEM footprint: 2 pipeline buffers per ref (+ margin),
    # capped at 64 MiB (v7x per-TC physical VMEM).
    vmem_needed = 2 * itemsize * TR * (TL_in + TL_out)
    vmem_limit = min(max(vmem_needed + (2 << 20), 16 << 20), 64 << 20)

    out2 = pl.pallas_call(
        _chomp_copy_kernel,
        out_shape=jax.ShapeDtypeStruct((R, L_out), x.dtype),
        grid_spec=pltpu.PrefetchScalarGridSpec(
            num_scalar_prefetch=0,
            grid=grid,
            in_specs=in_specs,
            out_specs=out_specs,
        ),
        compiler_params=pltpu.CompilerParams(
            dimension_semantics=dim_sem,
            vmem_limit_bytes=vmem_limit,
        ),
    )(x2)

    return out2.reshape(N, C, L_out)


if __name__ == "__main__":
    key = jax.random.PRNGKey(0)

    # 1) Small TCN-like case (batch=2, channels=4, length=16, chomp=3):
    #    exercises the full-row path with L_out < 128.
    x = jax.random.normal(key, (2, 4, 16), dtype=jnp.float32)
    out = jax.block_until_ready(chomp1d(x, 3))
    assert out.shape == (2, 4, 13) and out.dtype == x.dtype
    assert bool(jnp.array_equal(out, x[:, :, :-3])), "mismatch (full-row, tiny L)"

    # 2) Large chomp fraction -> tiled path with a ragged trailing column block.
    x2 = jax.random.normal(jax.random.PRNGKey(0), (2, 8, 256), dtype=jnp.float32)
    out2 = jax.block_until_ready(chomp1d(x2, 48))
    assert bool(jnp.array_equal(out2, x2[:, :, :-48])), "mismatch (tiled path)"

    # 3) Small chomp fraction, L_out >= 128 -> full-row path (no column sliver).
    x3 = jax.random.normal(jax.random.PRNGKey(0), (2, 4, 160), dtype=jnp.float32)
    out3 = jax.block_until_ready(chomp1d(x3, 2))
    assert bool(jnp.array_equal(out3, x3[:, :, :-2])), "mismatch (full-row path)"

    # 4) bf16 (packed dtype) through the full-row path.
    x4 = jax.random.normal(jax.random.PRNGKey(0), (2, 4, 256), dtype=jnp.bfloat16)
    out4 = jax.block_until_ready(chomp1d(x4, 16))
    assert bool(jnp.array_equal(out4, x4[:, :, :-16])), "mismatch (bf16 path)"

    print("KERNEL_OK")
</pallas_src>

<mosaic_0001>
module attributes {stable_mosaic.version = 11 : i64} {
  func.func @_chomp_copy_kernel(%arg0: i32, %arg1: memref<8x16xf32, #tpu.memory_space<vmem>>, %arg2: memref<8x13xf32, #tpu.memory_space<vmem>>) attributes {dimension_semantics = [#tpu.dimension_semantics<parallel>], iteration_bounds = array<i64: 1>, scalar_prefetch = 0 : i64, scratch_operands = 0 : i64, tpu.core_type = #tpu.core_type<tc>, window_params = [{transform_indices = @transform_0, window_bounds = array<i64: 8, 16>}, {transform_indices = @transform_1, window_bounds = array<i64: 8, 13>}]} {
    %c0 = arith.constant 0 : index
    %c0_0 = arith.constant 0 : index
    %0 = vector.load %arg1[%c0, %c0_0] : memref<8x16xf32, #tpu.memory_space<vmem>>, vector<8x13xf32>
    %c0_1 = arith.constant 0 : index
    %c0_2 = arith.constant 0 : index
    %1 = vector.load %arg2[%c0_1, %c0_2] : memref<8x13xf32, #tpu.memory_space<vmem>>, vector<8x13xf32>
    tpu.vector_store %arg2[%c0_1, %c0_2], %0 {strides = array<i32>} : memref<8x13xf32, #tpu.memory_space<vmem>>, vector<8x13xf32>,
    return
  }
  func.func @transform_0(%arg0: i32) -> (i32, i32) {
    %c0_i32 = arith.constant 0 : i32
    %c0_i32_0 = arith.constant 0 : i32
    return %arg0, %c0_i32 : i32, i32
  }
  func.func @transform_1(%arg0: i32) -> (i32, i32) {
    %c0_i32 = arith.constant 0 : i32
    %c0_i32_0 = arith.constant 0 : i32
    return %arg0, %c0_i32 : i32, i32
  }
}

</mosaic_0001>

<llo_original>
// kernel: tpu_custom_call.1
$region0: #{tpu_custom_call.1}
  #allocation0 [shape = 'u32[]', space=smem, size = 0x4, offset = 0x4, fixed_abs, tag = 'smem constant byte address 0x4 - core index']
  #allocation1 [shape = 'u32[144,128]{1,0:T(1,128)}', space=vmem, size = 0x12000, scoped, tag = 'internal scratch']
  %s0 = inlined_call_operand.hbm [shape: f32[8,16], index: 0, kind: input, shape index: {}]
  %s1 = inlined_call_operand.hbm [shape: f32[8,13], index: 1, kind: output, shape index: {}]
  %s2 = sld [smem:[#allocation0]]
  $region18: #{tpu_custom_call.1} parent=0
    _
  %s4 = ssub.s32 1, %s2
  %s5 = scalar_select 0, %s4, %s2
  $region1: #{tpu_custom_call.1} parent=0
    #allocation2 [shape = 'u8[4096]{0}', space=vmem, size = 0x1000, scoped, tag = 'input window, operand 0, single buffered']
    #allocation3 [shape = 's32[1]{0}', space=sflag, size = 0x4, scoped, tag = 'scoped memory for tpu_custom_call.1']
    #allocation4 [shape = 's32[1]{0}', space=sflag, size = 0x4, scoped, tag = 'scoped memory for tpu_custom_call.1']
    #allocation5 [shape = 'u8[4096]{0}', space=vmem, size = 0x1000, scoped, tag = 'output window, operand 0, single buffered']
    %6 = vsyncpa [#allocation3], 0
    %7 = vsyncpa [#allocation4], 0
    // Predicated region
    $region2: #{tpu_custom_call.1} parent=1 // pred_check
      _
    $region3: #{tpu_custom_call.1} parent=1 // pred_check_branch
      %9 = sbr.rel (0) target = $region5
    $region4: #{tpu_custom_call.1} parent=1 // pred_region
      %s11 = ssub.s32 128, 128
      %12 = vsyncadd [#allocation3], %s11
      %s14 = sshll.u32 [#allocation2], 4
      %s15 = int_to_ptr.vmem [resolvable:$true] %s14
      %17 = dma.hbm_to_vmem [thread:$0]  %s0, 128, %s15, [#allocation3]
    $region5: #{tpu_custom_call.1} parent=1 // pred_fallthru
      _
    // Predicated region
    $region6: #{tpu_custom_call.1} parent=1 // pred_check
      _
    $region7: #{tpu_custom_call.1} parent=1 // pred_check_branch
      %19 = sbr.rel (0) target = $region9
    $region8: #{tpu_custom_call.1} parent=1 // pred_region
      %20 = dma.done [#allocation3], 128
    $region9: #{tpu_custom_call.1} parent=1 // pred_fallthru
      _
    %v21 = vld [vmem:[#allocation2] sm:$0xff]
    %vm22 = vcmask 105472
    %23 = vst.msk [vmem:[#allocation5] sm:$0xff] %vm22, %v21
    // Predicated region
    $region10: #{tpu_custom_call.1} parent=1 // pred_check
      _
    $region11: #{tpu_custom_call.1} parent=1 // pred_check_branch
      %25 = sbr.rel (0) target = $region13
    $region12: #{tpu_custom_call.1} parent=1 // pred_region
      %s27 = ssub.s32 128, 128
      %28 = vsyncadd [#allocation4], %s27
      %s30 = sshll.u32 [#allocation5], 4
      %s31 = int_to_ptr.vmem [resolvable:$true] %s30
      %33 = dma.vmem_to_hbm [thread:$0]  %s31, 128, %s1, [#allocation4]
    $region13: #{tpu_custom_call.1} parent=1 // pred_fallthru
      _
    // Predicated region
    $region14: #{tpu_custom_call.1} parent=1 // pred_check
      _
    $region15: #{tpu_custom_call.1} parent=1 // pred_check_branch
      %35 = sbr.rel (0) target = $region17
    $region16: #{tpu_custom_call.1} parent=1 // pred_region
      %36 = dma.done [#allocation4], 128
    $region17: #{tpu_custom_call.1} parent=1 // pred_fallthru
      _
    %37 = vsyncpa [#allocation3], 1
    %38 = vsyncpa [#allocation4], 1

</llo_original>
